<compile_context>
chip_gen: v7x
topology: tpu7x:2x2x1
jax: 0.10.0
libtpu: 0.0.40
codegen_flags: <defaults>
</compile_context>

<pallas_src>
import jax
import jax.numpy as jnp
import numpy as np
from jax import lax
from jax.experimental import pallas as pl
from jax.experimental.pallas import tpu as pltpu

EPS = 1e-5  # PyTorch BatchNorm default eps


def _round_up(x, m):
    return (x + m - 1) // m * m


# ----------------------------------------------------------------------------
# Pallas kernel: fused (conv0+BN0+deconv taps) matmul + BN1 scale/shift epilogue
# ----------------------------------------------------------------------------
def hourglass_fused_kernel(x_ref, w_ref, scale_ref, shift_ref, o_ref):
    # x_ref    : (TR, K)   K = LP * 8 * (cin+1)  lane-packed shifted input taps
    # w_ref    : (K, M)    M = LP * 8 * C        block-diagonal fused weight
    # scale_ref: (1, M)    BN1 scale (f32), tiled per (lane-pack, parity)
    # shift_ref: (1, M)    BN1 shift (f32), tiled per (lane-pack, parity)
    # o_ref    : (TR, M)   compute_dtype output, parities packed on minor axis
    y = jnp.dot(x_ref[...], w_ref[...], preferred_element_type=jnp.float32)
    o_ref[...] = (y * scale_ref[...] + shift_ref[...]).astype(o_ref.dtype)


def _fused_matmul(xcat, wbig, scale_big, shift_big, out_dtype,
                  max_tile_rows=32768, vmem_budget=36 * 1024 * 1024):
    """xcat: (Rp, K) packed rows; returns (Rp, M) in out_dtype."""
    Rp, K = xcat.shape
    M = wbig.shape[1]
    in_sz = xcat.dtype.itemsize
    w_sz = wbig.dtype.itemsize
    out_sz = jnp.dtype(out_dtype).itemsize

    # Real double-buffered footprint: 2x (input tile + output tile) + 2x the
    # (tiny, grid-invariant) weight / scale / shift operands.
    row_bytes = 2 * (K * in_sz + M * out_sz)
    fixed_bytes = 2 * (K * M * w_sz + 2 * M * 4)

    row_cap = max(16, (vmem_budget - fixed_bytes) // row_bytes)
    tile_cap = int(min(max_tile_rows, row_cap))
    # NOTE: on v7x (2 TCs) very large tiles can collapse the grid to 1 step;
    # for big inputs tile_cap still yields >= a few steps, keeping both cores fed.
    num_tiles = -(-Rp // tile_cap)
    TR = _round_up(-(-Rp // num_tiles), 16)   # bf16 sublane packing friendly
    Rpad = TR * num_tiles
    if Rpad != Rp:
        xcat = jnp.pad(xcat, ((0, Rpad - Rp), (0, 0)))

    footprint = TR * row_bytes + fixed_bytes
    vmem_limit = int(min(max(int(footprint * 1.3), 16 * 1024 * 1024),
                         56 * 1024 * 1024))

    out = pl.pallas_call(
        hourglass_fused_kernel,
        out_shape=jax.ShapeDtypeStruct((Rpad, M), out_dtype),
        grid=(num_tiles,),
        in_specs=[
            pl.BlockSpec((TR, K), lambda i: (i, 0)),
            pl.BlockSpec((K, M), lambda i: (0, 0)),   # grid-invariant
            pl.BlockSpec((1, M), lambda i: (0, 0)),   # grid-invariant
            pl.BlockSpec((1, M), lambda i: (0, 0)),   # grid-invariant
        ],
        out_specs=pl.BlockSpec((TR, M), lambda i: (i, 0)),
        compiler_params=pltpu.CompilerParams(
            dimension_semantics=("parallel",),        # megacore sharding
            vmem_limit_bytes=vmem_limit,
        ),
    )(xcat, wbig, scale_big, shift_big)
    return out[:Rp]


# ----------------------------------------------------------------------------
# Weight folding: conv0(1x1x1) + BN0 + ConvTranspose3d taps + lane-pack blockdiag
# ----------------------------------------------------------------------------
def _tap_index(parity, shift):
    # Stride-2, k=3, pad=1, out_pad=1 transposed conv, per spatial dim:
    #   even output 2t   -> kernel k=1, input t     (shift 0)
    #   odd  output 2t+1 -> kernel k=0, input t+1 (shift 1) and k=2, input t (shift 0)
    if parity == 0:
        return 1 if shift == 0 else None
    return 0 if shift == 1 else 2


def build_fused_params(params, cin, lane_pack, compute_dtype):
    wt = params["wt"]                       # (Cin=C, Cout=C, 3, 3, 3)
    C = wt.shape[0]
    Ca = cin + 1                            # augmented with a ones channel

    scale0 = params["g0"] * lax.rsqrt(params["v0"] + EPS)
    shift0 = params["b0"] - params["m0"] * scale0
    scale1 = params["g1"] * lax.rsqrt(params["v1"] + EPS)
    shift1 = params["b1"] - params["m1"] * scale1

    # Effective 1x1x1 conv (+BN0) acting on the augmented input: (Ca, C)
    w0 = params["w0"].reshape(C, cin)                         # (C, cin)
    w0_eff = jnp.concatenate(
        [(w0 * scale0[:, None]).T, shift0[None, :]], axis=0)  # (Ca, C)

    K0, M0 = 8 * Ca, 8 * C
    wbase = jnp.zeros((K0, M0), jnp.float32)
    for sd in range(2):
        for sh in range(2):
            for sw in range(2):
                s = sd * 4 + sh * 2 + sw
                for pd in range(2):
                    for ph in range(2):
                        for pw in range(2):
                            kd = _tap_index(pd, sd)
                            kh = _tap_index(ph, sh)
                            kw = _tap_index(pw, sw)
                            if kd is None or kh is None or kw is None:
                                continue
                            p = pd * 4 + ph * 2 + pw
                            w_fused = w0_eff @ wt[:, :, kd, kh, kw]   # (Ca, C)
                            wbase = wbase.at[
                                s * Ca:(s + 1) * Ca, p * C:(p + 1) * C
                            ].set(w_fused)

    # Block-diagonal lane packing: LP voxels per packed row -> minor dim LP*M0.
    LP = lane_pack
    wbig = jnp.zeros((LP * K0, LP * M0), jnp.float32)
    for l in range(LP):
        wbig = wbig.at[l * K0:(l + 1) * K0, l * M0:(l + 1) * M0].set(wbase)

    scale_big = jnp.tile(scale1, 8 * LP).reshape(1, LP * M0).astype(jnp.float32)
    shift_big = jnp.tile(shift1, 8 * LP).reshape(1, LP * M0).astype(jnp.float32)
    # NOTE: the BN0 shift rows inside wbig are cast to compute_dtype with the
    # weights; use compute_dtype=f32 when strict accuracy is required.
    return wbig.astype(compute_dtype), scale_big, shift_big


# ----------------------------------------------------------------------------
# Full module forward (layout glue in plain JAX, hot path in the Pallas kernel)
# ----------------------------------------------------------------------------
def hourglass_forward(x_ncdhw, params, compute_dtype=jnp.bfloat16,
                      max_tile_rows=131072):
    N, cin, D, H, W = x_ncdhw.shape
    C = params["wt"].shape[0]
    Ca = cin + 1
    R = N * D * H * W

    # Lane pack along W so the kernel output minor dim is 256/128 (lane-dense).
    LP = 4 if W % 4 == 0 else (2 if W % 2 == 0 else 1)

    # NCDHW -> NDHWC, cast to compute dtype BEFORE the gather so all glue
    # traffic is bf16, append ones channel (carries the folded BN0 shift and
    # its correct zeroing at the upper spatial halo).
    x = jnp.transpose(x_ncdhw, (0, 2, 3, 4, 1)).astype(compute_dtype)
    x_aug = jnp.concatenate(
        [x, jnp.ones(x.shape[:-1] + (1,), compute_dtype)], axis=-1)  # (N,D,H,W,Ca)
    x_pad = jnp.pad(x_aug, ((0, 0), (0, 1), (0, 1), (0, 1), (0, 0)))

    # 8 shifted views packed on the channel axis (bf16).
    # TODO(synk): move this gather in-kernel with a manual halo DMA
    # (memory_space=pl.ANY + VMEM scratch per depth-plane tile) to remove the
    # remaining ~8x duplication of the augmented input.
    views = []
    for sd in range(2):
        for sh in range(2):
            for sw in range(2):
                views.append(
                    x_pad[:, sd:sd + D, sh:sh + H, sw:sw + W, :].reshape(R, Ca))
    xcat = jnp.concatenate(views, axis=-1)              # (R, 8*Ca)
    xcat = xcat.reshape(R // LP, LP * 8 * Ca)           # lane pack (free reshape)

    wbig, scale_big, shift_big = build_fused_params(params, cin, LP, compute_dtype)
    out = _fused_matmul(xcat, wbig, scale_big, shift_big,
                        out_dtype=compute_dtype,
                        max_tile_rows=max(16, max_tile_rows // LP))  # (R/LP, LP*8*C)

    # (R/LP, LP*8*C) -> NCDHW parity interleave (module-mandated layout),
    # single transpose on the compute-dtype result.
    out = out.reshape(N, D, H, W // LP, LP, 2, 2, 2, C)   # (N,D,H,Wp,wlo,pd,ph,pw,C)
    out = jnp.transpose(out, (0, 8, 1, 5, 2, 6, 3, 4, 7)) # (N,C,D,pd,H,ph,Wp,wlo,pw)
    return out.reshape(N, C, 2 * D, 2 * H, 2 * W)


# ----------------------------------------------------------------------------
# Pure-JAX reference (same math, via lax convolutions) for verification
# ----------------------------------------------------------------------------
def reference_forward(x, params):
    def bn(z, g, b, m, v):
        r = lambda a: a.reshape(1, -1, 1, 1, 1)
        return (z - r(m)) / jnp.sqrt(r(v) + EPS) * r(g) + r(b)

    y = lax.conv_general_dilated(
        x, params["w0"], window_strides=(1, 1, 1), padding="VALID",
        dimension_numbers=("NCDHW", "OIDHW", "NCDHW"),
        precision=lax.Precision.HIGHEST)
    y = bn(y, params["g0"], params["b0"], params["m0"], params["v0"])

    # ConvTranspose3d(k=3, s=2, p=1, op=1) == dilated conv with flipped kernel,
    # lhs_dilation=2, padding (k-1-p, k-1-p+op) = (1, 2) per spatial dim.
    k = jnp.flip(params["wt"], axis=(2, 3, 4)).transpose(1, 0, 2, 3, 4)
    z = lax.conv_general_dilated(
        y, k, window_strides=(1, 1, 1),
        padding=((1, 2), (1, 2), (1, 2)), lhs_dilation=(2, 2, 2),
        dimension_numbers=("NCDHW", "OIDHW", "NCDHW"),
        precision=lax.Precision.HIGHEST)
    return bn(z, params["g1"], params["b1"], params["m1"], params["v1"])


if __name__ == "__main__":
    key = jax.random.PRNGKey(0)
    ks = jax.random.split(key, 11)

    N, D, H, W = 2, 4, 8, 8
    inplanes = 8

    x = jax.random.normal(ks[0], (N, 3, D, H, W), jnp.float32)

    params = dict(
        # Conv3d(3, inplanes, k=1, bias=False) weight
        w0=jax.random.normal(ks[1], (inplanes, 3, 1, 1, 1), jnp.float32) * 0.3,
        # BatchNorm3d(inplanes) #0 (eval-mode running stats, deterministic)
        g0=1.0 + 0.1 * jax.random.normal(ks[2], (inplanes,), jnp.float32),
        b0=0.1 * jax.random.normal(ks[3], (inplanes,), jnp.float32),
        m0=0.1 * jax.random.normal(ks[4], (inplanes,), jnp.float32),
        v0=jax.random.uniform(ks[5], (inplanes,), jnp.float32, 0.5, 1.5),
        # ConvTranspose3d(inplanes, inplanes, k=3, s=2, p=1, op=1, bias=False)
        wt=jax.random.normal(ks[6], (inplanes, inplanes, 3, 3, 3), jnp.float32) * 0.1,
        # BatchNorm3d(inplanes) #1
        g1=1.0 + 0.1 * jax.random.normal(ks[7], (inplanes,), jnp.float32),
        b1=0.1 * jax.random.normal(ks[8], (inplanes,), jnp.float32),
        m1=0.1 * jax.random.normal(ks[9], (inplanes,), jnp.float32),
        v1=jax.random.uniform(ks[10], (inplanes,), jnp.float32, 0.5, 1.5),
    )

    fwd_bf16 = jax.jit(lambda xx, pp: hourglass_forward(
        xx, pp, compute_dtype=jnp.bfloat16))
    fwd_f32 = jax.jit(lambda xx, pp: hourglass_forward(
        xx, pp, compute_dtype=jnp.float32))

    out_bf16 = jax.block_until_ready(fwd_bf16(x, params))
    out_f32 = jax.block_until_ready(fwd_f32(x, params))
    assert out_bf16.shape == (N, inplanes, 2 * D, 2 * H, 2 * W), out_bf16.shape
    assert out_f32.shape == (N, inplanes, 2 * D, 2 * H, 2 * W), out_f32.shape

    ref = np.asarray(reference_forward(x, params))
    # f32 path (f32 operands, f32 output): strict check vs PyTorch-equivalent math.
    np.testing.assert_allclose(np.asarray(out_f32), ref, rtol=1e-3, atol=1e-3)
    # bf16 fast path (bf16 operands + bf16 output, f32 accumulation/epilogue).
    np.testing.assert_allclose(np.asarray(out_bf16, dtype=np.float32), ref,
                               rtol=3e-2, atol=6e-2)

    print("KERNEL_OK")
</pallas_src>

<mosaic_0001>
module attributes {stable_mosaic.version = 11 : i64} {
  func.func @hourglass_fused_kernel(%arg0: i32, %arg1: memref<128x128xbf16, #tpu.memory_space<vmem>>, %arg2: memref<128x256xbf16, #tpu.memory_space<vmem>>, %arg3: memref<1x256xf32, #tpu.memory_space<vmem>>, %arg4: memref<1x256xf32, #tpu.memory_space<vmem>>, %arg5: memref<128x256xbf16, #tpu.memory_space<vmem>>) attributes {dimension_semantics = [#tpu.dimension_semantics<parallel>], iteration_bounds = array<i64: 1>, scalar_prefetch = 0 : i64, scratch_operands = 0 : i64, tpu.core_type = #tpu.core_type<tc>, window_params = [{transform_indices = @transform_0, window_bounds = array<i64: 128, 128>}, {pipeline_mode = #tpu.pipeline_mode<synchronous>, transform_indices = @transform_1, window_bounds = array<i64: 128, 256>}, {pipeline_mode = #tpu.pipeline_mode<synchronous>, transform_indices = @transform_2, window_bounds = array<i64: 1, 256>}, {pipeline_mode = #tpu.pipeline_mode<synchronous>, transform_indices = @transform_3, window_bounds = array<i64: 1, 256>}, {transform_indices = @transform_4, window_bounds = array<i64: 128, 256>}]} {
    %c0 = arith.constant 0 : index
    %c0_0 = arith.constant 0 : index
    %0 = vector.load %arg1[%c0, %c0_0] : memref<128x128xbf16, #tpu.memory_space<vmem>>, vector<128x128xbf16>
    %c0_1 = arith.constant 0 : index
    %c0_2 = arith.constant 0 : index
    %1 = vector.load %arg2[%c0_1, %c0_2] : memref<128x256xbf16, #tpu.memory_space<vmem>>, vector<128x256xbf16>
    %cst = arith.constant dense<0.000000e+00> : vector<128x256xf32>
    %2 = tpu.matmul %0, %1, %cst {dimension_numbers = #tpu.dot_dimension_numbers<[1], [0], [0], [1], [0, 0, 1, 1], [], []>} : vector<128x128xbf16>, vector<128x256xbf16>, vector<128x256xf32> -> vector<128x256xf32>
    %c0_3 = arith.constant 0 : index
    %c0_4 = arith.constant 0 : index
    %3 = vector.load %arg3[%c0_3, %c0_4] : memref<1x256xf32, #tpu.memory_space<vmem>>, vector<1x256xf32>
    %4 = vector.broadcast %3 : vector<1x256xf32> to vector<128x256xf32>
    %5 = arith.mulf %2, %4 : vector<128x256xf32>
    %c0_5 = arith.constant 0 : index
    %c0_6 = arith.constant 0 : index
    %6 = vector.load %arg4[%c0_5, %c0_6] : memref<1x256xf32, #tpu.memory_space<vmem>>, vector<1x256xf32>
    %7 = vector.broadcast %6 : vector<1x256xf32> to vector<128x256xf32>
    %8 = arith.addf %5, %7 : vector<128x256xf32>
    %9 = arith.truncf %8 : vector<128x256xf32> to vector<128x256xbf16>
    %c0_7 = arith.constant 0 : index
    %c0_8 = arith.constant 0 : index
    %10 = vector.load %arg5[%c0_7, %c0_8] : memref<128x256xbf16, #tpu.memory_space<vmem>>, vector<128x256xbf16>
    tpu.vector_store %arg5[%c0_7, %c0_8], %9 {strides = array<i32>} : memref<128x256xbf16, #tpu.memory_space<vmem>>, vector<128x256xbf16>,
    return
  }
  func.func @transform_0(%arg0: i32) -> (i32, i32) {
    %c0_i32 = arith.constant 0 : i32
    %c0_i32_0 = arith.constant 0 : i32
    return %arg0, %c0_i32 : i32, i32
  }
  func.func @transform_1(%arg0: i32) -> (i32, i32) {
    %c0_i32 = arith.constant 0 : i32
    %c0_i32_0 = arith.constant 0 : i32
    %c0_i32_1 = arith.constant 0 : i32
    return %c0_i32, %c0_i32_0 : i32, i32
  }
  func.func @transform_2(%arg0: i32) -> (i32, i32) {
    %c0_i32 = arith.constant 0 : i32
    %c0_i32_0 = arith.constant 0 : i32
    %c0_i32_1 = arith.constant 0 : i32
    return %c0_i32, %c0_i32_0 : i32, i32
  }
  func.func @transform_3(%arg0: i32) -> (i32, i32) {
    %c0_i32 = arith.constant 0 : i32
    %c0_i32_0 = arith.constant 0 : i32
    %c0_i32_1 = arith.constant 0 : i32
    return %c0_i32, %c0_i32_0 : i32, i32
  }
  func.func @transform_4(%arg0: i32) -> (i32, i32) {
    %c0_i32 = arith.constant 0 : i32
    %c0_i32_0 = arith.constant 0 : i32
    return %arg0, %c0_i32 : i32, i32
  }
}

</mosaic_0001>

<llo_original>
// kernel: tile.18
$region0: #{tile.18}
  #allocation0 [shape = 's32[1]{0}', space=sflag, size = 0x4, scoped, tag = 'scoped memory for tile.18']
  %s0 = inlined_call_operand.vmem [shape: f32[8], index: 0, kind: input, shape index: {}]
  %s1 = inlined_call_operand.vmem [shape: f32[32,8], index: 1, kind: output, shape index: {}]
  // Predicated region
  $region2: #{tile.18} parent=0 // pred_check
    _
  $region3: #{tile.18} parent=0 // pred_check_branch
    %3 = sbr.rel (0) target = $region5
  $region4: #{tile.18} parent=0 // pred_region
    _
  $region5: #{tile.18} parent=0 // pred_fallthru
    _
  %v4 = vld [vmem:[%s0] ss:$0 sm:$0xff]
  %5 = vst [vmem:[%s1] sm:$0xff] %v4
  %s6 = scalar_lea.vmem %s1, 8
  %7 = vst [vmem:[%s6] sm:$0xff] %v4
  %s8 = scalar_lea.vmem %s1, 16
  %9 = vst [vmem:[%s8] sm:$0xff] %v4
  %s10 = scalar_lea.vmem %s1, 24
  %11 = vst [vmem:[%s10] sm:$0xff] %v4

// kernel: tile.19
$region0: #{tile.19}
  %s0 = inlined_call_operand.vmem [shape: f32[32,8], index: 0, kind: input, shape index: {}]
  %s1 = inlined_call_operand.vmem [shape: f32[1,256], index: 1, kind: output, shape index: {}]
  $region1: #{tile.19} parent=0
    #allocation0 [shape = 'u8[8192]{0}', space=vmem, size = 0x2000, scoped, tag = 'scoped mem for output reshape']
    %s2 = smov 3
    %v3 = vld [vmem:[%s0] ss:$16 sm:%s2]
    %vm4 = vcmask 64512
    %5 = vst.msk [vmem:[#allocation0] ss:$8 sm:$0x3] %vm4, %v3
    %s6 = scalar_lea.vmem %s0, 15
    %s7 = smov 3
    %v8 = vld [vmem:[%s6] ss:$16 sm:%s7]
    %9 = vrot.lane.b32.xlu0 %v8, 120
    %v10 = vpop.permute.xlu0 %9
    %vm11 = vcmask 1048512
    %12 = vst.msk [vmem:[#allocation0] ss:$8 sm:$0x3] %vm11, %v10
    %s13 = scalar_lea.vmem %s0, 14
    %s14 = smov 3
    %v15 = vld [vmem:[%s13] ss:$16 sm:%s14]
    %16 = vrot.lane.b32.xlu0 %v15, 112
    %v17 = vpop.permute.xlu0 %16
    %vm18 = vcmask 982912
    %19 = vst.msk [vmem:[#allocation0] ss:$8 sm:$0x3] %vm18, %v17
    %s20 = scalar_lea.vmem %s0, 13
    %s21 = smov 3
    %v22 = vld [vmem:[%s20] ss:$16 sm:%s21]
    %23 = vrot.lane.b32.xlu0 %v22, 104
    %v24 = vpop.permute.xlu0 %23
    %vm25 = vcmask 917312
    %26 = vst.msk [vmem:[#allocation0] ss:$8 sm:$0x3] %vm25, %v24
    %s27 = scalar_lea.vmem %s0, 12
    %s28 = smov 3
    %v29 = vld [vmem:[%s27] ss:$16 sm:%s28]
    %30 = vrot.lane.b32.xlu0 %v29, 96
    %v31 = vpop.permute.xlu0 %30
    %vm32 = vcmask 851712
    %33 = vst.msk [vmem:[#allocation0] ss:$8 sm:$0x3] %vm32, %v31
    %s34 = scalar_lea.vmem %s0, 11
    %s35 = smov 3
    %v36 = vld [vmem:[%s34] ss:$16 sm:%s35]
    %37 = vrot.lane.b32.xlu0 %v36, 88
    %v38 = vpop.permute.xlu0 %37
    %vm39 = vcmask 786112
    %40 = vst.msk [vmem:[#allocation0] ss:$8 sm:$0x3] %vm39, %v38
    %s41 = scalar_lea.vmem %s0, 10
    %s42 = smov 3
    %v43 = vld [vmem:[%s41] ss:$16 sm:%s42]
    %44 = vrot.lane.b32.xlu0 %v43, 80
    %v45 = vpop.permute.xlu0 %44
    %vm46 = vcmask 720512
    %47 = vst.msk [vmem:[#allocation0] ss:$8 sm:$0x3] %vm46, %v45
    %s48 = scalar_lea.vmem %s0, 9
    %s49 = smov 3
    %v50 = vld [vmem:[%s48] ss:$16 sm:%s49]
    %51 = vrot.lane.b32.xlu0 %v50, 72
    %v52 = vpop.permute.xlu0 %51
    %vm53 = vcmask 654912
    %54 = vst.msk [vmem:[#allocation0] ss:$8 sm:$0x3] %vm53, %v52
    %s55 = scalar_lea.vmem %s0, 8
    %s56 = smov 3
    %v57 = vld [vmem:[%s55] ss:$16 sm:%s56]
    %58 = vrot.lane.b32.xlu0 %v57, 64
    %v59 = vpop.permute.xlu0 %58
    %vm60 = vcmask 589312
    %61 = vst.msk [vmem:[#allocation0] ss:$8 sm:$0x3] %vm60, %v59
    %s62 = scalar_lea.vmem %s0, 7
    %s63 = smov 3
    %v64 = vld [vmem:[%s62] ss:$16 sm:%s63]
    %65 = vrot.lane.b32.xlu0 %v64, 56
    %v66 = vpop.permute.xlu0 %65
    %vm67 = vcmask 523712
    %68 = vst.msk [vmem:[#allocation0] ss:$8 sm:$0x3] %vm67, %v66
    %s69 = scalar_lea.vmem %s0, 6
    %s70 = smov 3
    %v71 = vld [vmem:[%s69] ss:$16 sm:%s70]
    %72 = vrot.lane.b32.xlu0 %v71, 48
    %v73 = vpop.permute.xlu0 %72
    %vm74 = vcmask 458112
    %75 = vst.msk [vmem:[#allocation0] ss:$8 sm:$0x3] %vm74, %v73
    %s76 = scalar_lea.vmem %s0, 5
    %s77 = smov 3
    %v78 = vld [vmem:[%s76] ss:$16 sm:%s77]
    %79 = vrot.lane.b32.xlu0 %v78, 40
    %v80 = vpop.permute.xlu0 %79
    %vm81 = vcmask 392512
    %82 = vst.msk [vmem:[#allocation0] ss:$8 sm:$0x3] %vm81, %v80
    %s83 = scalar_lea.vmem %s0, 4
    %s84 = smov 3
    %v85 = vld [vmem:[%s83] ss:$16 sm:%s84]
    %86 = vrot.lane.b32.xlu0 %v85, 32
    %v87 = vpop.permute.xlu0 %86
    %vm88 = vcmask 326912
    %89 = vst.msk [vmem:[#allocation0] ss:$8 sm:$0x3] %vm88, %v87
    %s90 = scalar_lea.vmem %s0, 3
    %s91 = smov 3
    %v92 = vld [vmem:[%s90] ss:$16 sm:%s91]
    %93 = vrot.lane.b32.xlu0 %v92, 24
    %v94 = vpop.permute.xlu0 %93
    %vm95 = vcmask 261312
    %96 = vst.msk [vmem:[#allocation0] ss:$8 sm:$0x3] %vm95, %v94
    %s97 = scalar_lea.vmem %s0, 2
    %s98 = smov 3
    %v99 = vld [vmem:[%s97] ss:$16 sm:%s98]
    %100 = vrot.lane.b32.xlu0 %v99, 16
    %v101 = vpop.permute.xlu0 %100
    %vm102 = vcmask 195712
    %103 = vst.msk [vmem:[#allocation0] ss:$8 sm:$0x3] %vm102, %v101
    %s104 = scalar_lea.vmem %s0, 1
    %s105 = smov 3
    %v106 = vld [vmem:[%s104] ss:$16 sm:%s105]
    %107 = vrot.lane.b32.xlu0 %v106, 8
    %v108 = vpop.permute.xlu0 %107
    %vm109 = vcmask 130112
    %110 = vst.msk [vmem:[#allocation0] ss:$8 sm:$0x3] %vm109, %v108
    %s112 = sshllo.u32 0, 1
    %v114 = vld [vmem:[#allocation0] sm:%s112]
    %s115 = sshllo.u32 0, 1
    %116 = vst [vmem:[%s1] sm:%s115] %v114
    %s117 = scalar_lea.vmem [#allocation0], 8
    %v118 = vld [vmem:[%s117] sm:%s112]
    %s119 = sshllo.u32 0, 1
    %s120 = scalar_lea.vmem %s1, 1
    %121 = vst [vmem:[%s120] sm:%s119] %v118

// kernel: _lambda_.1
$region0: #{_lambda_.1}
  #allocation0 [shape = 'u32[]', space=smem, size = 0x4, offset = 0x4, fixed_abs, tag = 'smem constant byte address 0x4 - core index']
  #allocation1 [shape = 'u32[144,128]{1,0:T(1,128)}', space=vmem, size = 0x12000, scoped, tag = 'internal scratch']
  %s0 = inlined_call_operand.vmem [shape: bf16[128,128], index: 0, kind: input, shape index: {}]
  %s1 = inlined_call_operand.vmem [shape: bf16[128,256], index: 1, kind: input, shape index: {}]
  %s2 = inlined_call_operand.vmem [shape: f32[1,256], index: 2, kind: input, shape index: {}]
  %s3 = inlined_call_operand.vmem [shape: f32[1,256], index: 3, kind: input, shape index: {}]
  %s4 = inlined_call_operand.vmem [shape: bf16[128,256], index: 4, kind: output, shape index: {}]
  %s5 = sld [smem:[#allocation0]]
  $region26: #{_lambda_.1} parent=0
    _
  %s7 = ssub.s32 1, %s5
  %s8 = scalar_select 0, %s7, %s5
  // Predicated region
  $region2: #{_lambda_.1} parent=0 // pred_check
    _
  $region3: #{_lambda_.1} parent=0 // pred_check_branch
    %10 = sbr.rel (0) target = $region5
  $region4: #{_lambda_.1} parent=0 // pred_region
    _
  $region5: #{_lambda_.1} parent=0 // pred_fallthru
    _
  // Predicated region
  $region6: #{_lambda_.1} parent=0 // pred_check
    _
  $region7: #{_lambda_.1} parent=0 // pred_check_branch
    %12 = sbr.rel (0) target = $region9
  $region8: #{_lambda_.1} parent=0 // pred_region
    _
  $region9: #{_lambda_.1} parent=0 // pred_fallthru
    _
  // Predicated region
  $region10: #{_lambda_.1} parent=0 // pred_check
    _
  $region11: #{_lambda_.1} parent=0 // pred_check_branch
    %14 = sbr.rel (0) target = $region13
  $region12: #{_lambda_.1} parent=0 // pred_region
    _
  $region13: #{_lambda_.1} parent=0 // pred_fallthru
    _
  // Predicated region
  $region14: #{_lambda_.1} parent=0 // pred_check
    _
  $region15: #{_lambda_.1} parent=0 // pred_check_branch
    %16 = sbr.rel (0) target = $region17
  $region16: #{_lambda_.1} parent=0 // pred_region
    _
  $region17: #{_lambda_.1} parent=0 // pred_fallthru
    _
  %v18 = vld [vmem:[%s0] sm:$0xf]
  %v19 = vld [vmem:[%s0 + $0x4] sm:$0xf]
  %v20 = vld [vmem:[%s0 + $0x8] sm:$0xf]
  %v21 = vld [vmem:[%s0 + $0xc] sm:$0xf]
  %v22 = vld [vmem:[%s0 + $0x10] sm:$0xf]
  %v23 = vld [vmem:[%s0 + $0x14] sm:$0xf]
  %v24 = vld [vmem:[%s0 + $0x18] sm:$0xf]
  %v25 = vld [vmem:[%s0 + $0x1c] sm:$0xf]
  %v26 = vld [vmem:[%s0 + $0x20] sm:$0xf]
  %v27 = vld [vmem:[%s0 + $0x24] sm:$0xf]
  %v28 = vld [vmem:[%s0 + $0x28] sm:$0xf]
  %v29 = vld [vmem:[%s0 + $0x2c] sm:$0xf]
  %v30 = vld [vmem:[%s0 + $0x30] sm:$0xf]
  %v31 = vld [vmem:[%s0 + $0x34] sm:$0xf]
  %v32 = vld [vmem:[%s0 + $0x38] sm:$0xf]
  %v33 = vld [vmem:[%s0 + $0x3c] sm:$0xf]
  %v34 = vld [vmem:[%s1] sm:$0xff]
  %v35 = vld [vmem:[%s1 + $0x8] sm:$0xff]
  %v36 = vld [vmem:[%s1 + $0x10] sm:$0xff]
  %v37 = vld [vmem:[%s1 + $0x18] sm:$0xff]
  %v38 = vld [vmem:[%s1 + $0x20] sm:$0xff]
  %v39 = vld [vmem:[%s1 + $0x28] sm:$0xff]
  %v40 = vld [vmem:[%s1 + $0x30] sm:$0xff]
  %v41 = vld [vmem:[%s1 + $0x38] sm:$0xff]
  %v42 = vld [vmem:[%s1 + $0x40] sm:$0xff]
  %v43 = vld [vmem:[%s1 + $0x48] sm:$0xff]
  %v44 = vld [vmem:[%s1 + $0x50] sm:$0xff]
  %v45 = vld [vmem:[%s1 + $0x58] sm:$0xff]
  %v46 = vld [vmem:[%s1 + $0x60] sm:$0xff]
  %v47 = vld [vmem:[%s1 + $0x68] sm:$0xff]
  %v48 = vld [vmem:[%s1 + $0x70] sm:$0xff]
  %v49 = vld [vmem:[%s1 + $0x78] sm:$0xff]
  %v66 = vunpack.c.l.b16 %v18
  %v67 = vunpack.c.l.b16 %v19
  %v68 = vunpack.c.l.b16 %v20
  %v69 = vunpack.c.l.b16 %v21
  %v70 = vunpack.c.l.b16 %v22
  %v71 = vunpack.c.l.b16 %v23
  %v72 = vunpack.c.l.b16 %v24
  %v73 = vunpack.c.l.b16 %v25
  %v74 = vunpack.c.l.b16 %v26
  %v75 = vunpack.c.l.b16 %v27
  %v76 = vunpack.c.l.b16 %v28
  %v77 = vunpack.c.l.b16 %v29
  %v78 = vunpack.c.l.b16 %v30
  %v79 = vunpack.c.l.b16 %v31
  %v80 = vunpack.c.l.b16 %v32
  %v81 = vunpack.c.l.b16 %v33
  %v82 = vpack.c.b16 %v67, %v66
  %v83 = vpack.c.b16 %v69, %v68
  %v84 = vpack.c.b16 %v71, %v70
  %v85 = vpack.c.b16 %v73, %v72
  %v86 = vpack.c.b16 %v75, %v74
  %v87 = vpack.c.b16 %v77, %v76
  %v88 = vpack.c.b16 %v79, %v78
  %v89 = vpack.c.b16 %v81, %v80
  %v114 = vunpack.c.l.b16 %v34
  %v115 = vunpack.c.h.b16 %v34
  %v116 = vunpack.c.l.b16 %v35
  %v117 = vunpack.c.h.b16 %v35
  %v118 = vunpack.c.l.b16 %v36
  %v119 = vunpack.c.h.b16 %v36
  %v120 = vunpack.c.l.b16 %v37
  %v121 = vunpack.c.h.b16 %v37
  %v122 = vunpack.c.l.b16 %v38
  %v123 = vunpack.c.h.b16 %v38
  %v124 = vunpack.c.l.b16 %v39
  %v125 = vunpack.c.h.b16 %v39
  %v126 = vunpack.c.l.b16 %v40
  %v127 = vunpack.c.h.b16 %v40
  %v128 = vunpack.c.l.b16 %v41
  %v129 = vunpack.c.h.b16 %v41
  %v130 = vunpack.c.l.b16 %v42
  %v131 = vunpack.c.h.b16 %v42
  %v132 = vunpack.c.l.b16 %v43
  %v133 = vunpack.c.h.b16 %v43
  %v134 = vunpack.c.l.b16 %v44
  %v135 = vunpack.c.h.b16 %v44
  %v136 = vunpack.c.l.b16 %v45
  %v137 = vunpack.c.h.b16 %v45
  %v138 = vunpack.c.l.b16 %v46
  %v139 = vunpack.c.h.b16 %v46
  %v140 = vunpack.c.l.b16 %v47
  %v141 = vunpack.c.h.b16 %v47
  %v142 = vunpack.c.l.b16 %v48
  %v143 = vunpack.c.h.b16 %v48
  %v144 = vunpack.c.l.b16 %v49
  %v145 = vunpack.c.h.b16 %v49
  %v146 = vpack.c.b16 %v116, %v114
  %v147 = vpack.c.b16 %v117, %v115
  %v148 = vpack.c.b16 %v120, %v118
  %v149 = vpack.c.b16 %v121, %v119
  %v150 = vpack.c.b16 %v124, %v122
  %v151 = vpack.c.b16 %v125, %v123
  %v152 = vpack.c.b16 %v128, %v126
  %v153 = vpack.c.b16 %v129, %v127
  %v154 = vpack.c.b16 %v132, %v130
  %v155 = vpack.c.b16 %v133, %v131
  %v156 = vpack.c.b16 %v136, %v134
  %v157 = vpack.c.b16 %v137, %v135
  %v158 = vpack.c.b16 %v140, %v138
  %v159 = vpack.c.b16 %v141, %v139
  %v160 = vpack.c.b16 %v144, %v142
  %v161 = vpack.c.b16 %v145, %v143
  %178 = vmatprep.subr.bf16.mxu0 %v147
  %179 = vmatpush1.bf16.msra.mxu0 %v146
  %180 = vmatprep.subr.bf16.mxu0 %v149
  %181 = vmatpush1.bf16.msra.mxu0 %v148
  %182 = vmatprep.subr.bf16.mxu0 %v151
  %183 = vmatpush1.bf16.msra.mxu0 %v150
  %184 = vmatprep.subr.bf16.mxu0 %v153
  %185 = vmatpush1.bf16.msra.mxu0 %v152
  %186 = vmatprep.subr.bf16.mxu0 %v155
  %187 = vmatpush1.bf16.msra.mxu0 %v154
  %188 = vmatprep.subr.bf16.mxu0 %v157
  %189 = vmatpush1.bf16.msra.mxu0 %v156
  %190 = vmatprep.subr.bf16.mxu0 %v159
  %191 = vmatpush1.bf16.msra.mxu0 %v158
  %192 = vmatprep.subr.bf16.mxu0 %v161
  %193 = vmatpush1.bf16.msra.mxu0 %v160
  %194 = vmatprep.subr.bf16.mxu0 0
  %195 = vmatpush1.bf16.msra.mxu0 0
  %196 = vmatprep.subr.bf16.mxu0 0
  %197 = vmatpush1.bf16.msra.mxu0 0
  %198 = vmatprep.subr.bf16.mxu0 0
  %199 = vmatpush1.bf16.msra.mxu0 0
  %200 = vmatprep.subr.bf16.mxu0 0
  %201 = vmatpush1.bf16.msra.mxu0 0
  %202 = vmatprep.subr.bf16.mxu0 0
  %203 = vmatpush1.bf16.msra.mxu0 0
  %204 = vmatprep.subr.bf16.mxu0 0
  %205 = vmatpush1.bf16.msra.mxu0 0
  %206 = vmatprep.subr.bf16.mxu0 0
  %207 = vmatpush1.bf16.msra.mxu0 0
  %208 = vmatprep.subr.bf16.mxu0 0
  %209 = vmatpush1.bf16.msra.mxu0 0
  %210 = vmatprep.mubr.bf16.mxu0 0
  %211 = vmatmul.mubr.bf16.gmra.mrb[0].mxu0 %v82
  %v212 = vpop.f32.mrb[0].mxu0
  %v213 = vadd.f32 0.0, %v212
  %v214 = vpop.f32.mrb[0].mxu0
  %v215 = vadd.f32 0.0, %v214
  %v216 = vpop.f32.mrb[0].mxu0
  %v217 = vadd.f32 0.0, %v216
  %v218 = vpop.f32.mrb[0].mxu0
  %v219 = vadd.f32 0.0, %v218
  %220 = vmatprep.mubr.bf16.mxu0 0
  %221 = vmatmul.mubr.bf16.gmra.mrb[0].mxu0 %v83
  %v222 = vpop.f32.mrb[0].mxu0
  %v223 = vadd.f32 0.0, %v222
  %v224 = vpop.f32.mrb[0].mxu0
  %v225 = vadd.f32 0.0, %v224
  %v226 = vpop.f32.mrb[0].mxu0
  %v227 = vadd.f32 0.0, %v226
  %v228 = vpop.f32.mrb[0].mxu0
  %v229 = vadd.f32 0.0, %v228
  %230 = vmatprep.mubr.bf16.mxu0 0
  %231 = vmatmul.mubr.bf16.gmra.mrb[0].mxu0 %v84
  %v232 = vpop.f32.mrb[0].mxu0
  %v233 = vadd.f32 0.0, %v232
  %v234 = vpop.f32.mrb[0].mxu0
  %v235 = vadd.f32 0.0, %v234
  %v236 = vpop.f32.mrb[0].mxu0
  %v237 = vadd.f32 0.0, %v236
  %v238 = vpop.f32.mrb[0].mxu0
  %v239 = vadd.f32 0.0, %v238
  %240 = vmatprep.mubr.bf16.mxu0 0
  %241 = vmatmul.mubr.bf16.gmra.mrb[0].mxu0 %v85
  %v242 = vpop.f32.mrb[0].mxu0
  %v243 = vadd.f32 0.0, %v242
  %v244 = vpop.f32.mrb[0].mxu0
  %v245 = vadd.f32 0.0, %v244
  %v246 = vpop.f32.mrb[0].mxu0
  %v247 = vadd.f32 0.0, %v246
  %v248 = vpop.f32.mrb[0].mxu0
  %v249 = vadd.f32 0.0, %v248
  %250 = vmatprep.mubr.bf16.mxu0 0
  %251 = vmatmul.mubr.bf16.gmra.mrb[0].mxu0 %v86
  %v252 = vpop.f32.mrb[0].mxu0
  %v253 = vadd.f32 0.0, %v252
  %v254 = vpop.f32.mrb[0].mxu0
  %v255 = vadd.f32 0.0, %v254
  %v256 = vpop.f32.mrb[0].mxu0
  %v257 = vadd.f32 0.0, %v256
  %v258 = vpop.f32.mrb[0].mxu0
  %v259 = vadd.f32 0.0, %v258
  %260 = vmatprep.mubr.bf16.mxu0 0
  %261 = vmatmul.mubr.bf16.gmra.mrb[0].mxu0 %v87
  %v262 = vpop.f32.mrb[0].mxu0
  %v263 = vadd.f32 0.0, %v262
  %v264 = vpop.f32.mrb[0].mxu0
  %v265 = vadd.f32 0.0, %v264
  %v266 = vpop.f32.mrb[0].mxu0
  %v267 = vadd.f32 0.0, %v266
  %v268 = vpop.f32.mrb[0].mxu0
  %v269 = vadd.f32 0.0, %v268
  %270 = vmatprep.mubr.bf16.mxu0 0
  %271 = vmatmul.mubr.bf16.gmra.mrb[0].mxu0 %v88
  %v272 = vpop.f32.mrb[0].mxu0
  %v273 = vadd.f32 0.0, %v272
  %v274 = vpop.f32.mrb[0].mxu0
  %v275 = vadd.f32 0.0, %v274
  %v276 = vpop.f32.mrb[0].mxu0
  %v277 = vadd.f32 0.0, %v276
  %v278 = vpop.f32.mrb[0].mxu0
  %v279 = vadd.f32 0.0, %v278
  %280 = vmatprep.mubr.bf16.mxu0 0
  %281 = vmatmul.mubr.bf16.gmra.mrb[0].mxu0 %v89
  %v282 = vpop.f32.mrb[0].mxu0
  %v283 = vadd.f32 0.0, %v282
  %v284 = vpop.f32.mrb[0].mxu0
  %v285 = vadd.f32 0.0, %v284
  %v286 = vpop.f32.mrb[0].mxu0
  %v287 = vadd.f32 0.0, %v286
  %v288 = vpop.f32.mrb[0].mxu0
  %v289 = vadd.f32 0.0, %v288
  %290 = vdwg.mxu0
  %v291 = vld [vmem:[%s2] sm:$0x3]
  %v293 = vlaneseq
  %v294 = vshrl.u32 %v293, 7
  %v295 = vsub.s32 0, %v294
  %v296 = vrot.slane %v291, %v295
  %v297 = vlaneseq
  %v298 = vshrl.u32 %v297, 7
  %v299 = vsub.s32 1, %v298
  %v300 = vrot.slane %v291, %v299
  %v303 = vmul.f32 %v213, %v296
  %v304 = vmul.f32 %v215, %v300
  %v305 = vmul.f32 %v217, %v296
  %v306 = vmul.f32 %v219, %v300
  %v307 = vmul.f32 %v223, %v296
  %v308 = vmul.f32 %v225, %v300
  %v309 = vmul.f32 %v227, %v296
  %v310 = vmul.f32 %v229, %v300
  %v311 = vmul.f32 %v233, %v296
  %v312 = vmul.f32 %v235, %v300
  %v313 = vmul.f32 %v237, %v296
  %v314 = vmul.f32 %v239, %v300
  %v315 = vmul.f32 %v243, %v296
  %v316 = vmul.f32 %v245, %v300
  %v317 = vmul.f32 %v247, %v296
  %v318 = vmul.f32 %v249, %v300
  %v319 = vmul.f32 %v253, %v296
  %v320 = vmul.f32 %v255, %v300
  %v321 = vmul.f32 %v257, %v296
  %v322 = vmul.f32 %v259, %v300
  %v323 = vmul.f32 %v263, %v296
  %v324 = vmul.f32 %v265, %v300
  %v325 = vmul.f32 %v267, %v296
  %v326 = vmul.f32 %v269, %v300
  %v327 = vmul.f32 %v273, %v296
  %v328 = vmul.f32 %v275, %v300
  %v329 = vmul.f32 %v277, %v296
  %v330 = vmul.f32 %v279, %v300
  %v331 = vmul.f32 %v283, %v296
  %v332 = vmul.f32 %v285, %v300
  %v333 = vmul.f32 %v287, %v296
  %v334 = vmul.f32 %v289, %v300
  %v335 = vld [vmem:[%s3] sm:$0x3]
  %v337 = vlaneseq
  %v338 = vshrl.u32 %v337, 7
  %v339 = vsub.s32 0, %v338
  %v340 = vrot.slane %v335, %v339
  %v341 = vlaneseq
  %v342 = vshrl.u32 %v341, 7
  %v343 = vsub.s32 1, %v342
  %v344 = vrot.slane %v335, %v343
  %v347 = vadd.f32 %v303, %v340
  %v348 = vadd.f32 %v304, %v344
  %v349 = vadd.f32 %v305, %v340
  %v350 = vadd.f32 %v306, %v344
  %v351 = vadd.f32 %v307, %v340
  %v352 = vadd.f32 %v308, %v344
  %v353 = vadd.f32 %v309, %v340
  %v354 = vadd.f32 %v310, %v344
  %v355 = vadd.f32 %v311, %v340
  %v356 = vadd.f32 %v312, %v344
  %v357 = vadd.f32 %v313, %v340
  %v358 = vadd.f32 %v314, %v344
  %v359 = vadd.f32 %v315, %v340
  %v360 = vadd.f32 %v316, %v344
  %v361 = vadd.f32 %v317, %v340
  %v362 = vadd.f32 %v318, %v344
  %v363 = vadd.f32 %v319, %v340
  %v364 = vadd.f32 %v320, %v344
  %v365 = vadd.f32 %v321, %v340
  %v366 = vadd.f32 %v322, %v344
  %v367 = vadd.f32 %v323, %v340
  %v368 = vadd.f32 %v324, %v344
  %v369 = vadd.f32 %v325, %v340
  %v370 = vadd.f32 %v326, %v344
  %v371 = vadd.f32 %v327, %v340
  %v372 = vadd.f32 %v328, %v344
  %v373 = vadd.f32 %v329, %v340
  %v374 = vadd.f32 %v330, %v344
  %v375 = vadd.f32 %v331, %v340
  %v376 = vadd.f32 %v332, %v344
  %v377 = vadd.f32 %v333, %v340
  %v378 = vadd.f32 %v334, %v344
  %v379 = vpack.c.bf16 %v349, %v347
  %v380 = vpack.c.bf16 %v350, %v348
  %v381 = vpack.c.bf16 %v353, %v351
  %v382 = vpack.c.bf16 %v354, %v352
  %v383 = vpack.c.bf16 %v357, %v355
  %v384 = vpack.c.bf16 %v358, %v356
  %v385 = vpack.c.bf16 %v361, %v359
  %v386 = vpack.c.bf16 %v362, %v360
  %v387 = vpack.c.bf16 %v365, %v363
  %v388 = vpack.c.bf16 %v366, %v364
  %v389 = vpack.c.bf16 %v369, %v367
  %v390 = vpack.c.bf16 %v370, %v368
  %v391 = vpack.c.bf16 %v373, %v371
  %v392 = vpack.c.bf16 %v374, %v372
  %v393 = vpack.c.bf16 %v377, %v375
  %v394 = vpack.c.bf16 %v378, %v376
  %v411 = vunpack.c.l.b16 %v379
  %v412 = vunpack.c.l.b16 %v380
  %v413 = vunpack.c.h.b16 %v379
  %v414 = vunpack.c.h.b16 %v380
  %v415 = vunpack.c.l.b16 %v381
  %v416 = vunpack.c.l.b16 %v382
  %v417 = vunpack.c.h.b16 %v381
  %v418 = vunpack.c.h.b16 %v382
  %v419 = vunpack.c.l.b16 %v383
  %v420 = vunpack.c.l.b16 %v384
  %v421 = vunpack.c.h.b16 %v383
  %v422 = vunpack.c.h.b16 %v384
  %v423 = vunpack.c.l.b16 %v385
  %v424 = vunpack.c.l.b16 %v386
  %v425 = vunpack.c.h.b16 %v385
  %v426 = vunpack.c.h.b16 %v386
  %v427 = vunpack.c.l.b16 %v387
  %v428 = vunpack.c.l.b16 %v388
  %v429 = vunpack.c.h.b16 %v387
  %v430 = vunpack.c.h.b16 %v388
  %v431 = vunpack.c.l.b16 %v389
  %v432 = vunpack.c.l.b16 %v390
  %v433 = vunpack.c.h.b16 %v389
  %v434 = vunpack.c.h.b16 %v390
  %v435 = vunpack.c.l.b16 %v391
  %v436 = vunpack.c.l.b16 %v392
  %v437 = vunpack.c.h.b16 %v391
  %v438 = vunpack.c.h.b16 %v392
  %v439 = vunpack.c.l.b16 %v393
  %v440 = vunpack.c.l.b16 %v394
  %v441 = vunpack.c.h.b16 %v393
  %v442 = vunpack.c.h.b16 %v394
  %v443 = vpack.c.b16 %v412, %v411
  %v444 = vpack.c.b16 %v414, %v413
  %v445 = vpack.c.b16 %v416, %v415
  %v446 = vpack.c.b16 %v418, %v417
  %v447 = vpack.c.b16 %v420, %v419
  %v448 = vpack.c.b16 %v422, %v421
  %v449 = vpack.c.b16 %v424, %v423
  %v450 = vpack.c.b16 %v426, %v425
  %v451 = vpack.c.b16 %v428, %v427
  %v452 = vpack.c.b16 %v430, %v429
  %v453 = vpack.c.b16 %v432, %v431
  %v454 = vpack.c.b16 %v434, %v433
  %v455 = vpack.c.b16 %v436, %v435
  %v456 = vpack.c.b16 %v438, %v437
  %v457 = vpack.c.b16 %v440, %v439
  %v458 = vpack.c.b16 %v442, %v441
  %475 = vst [vmem:[%s4] sm:$0xff] %v443
  %476 = vst [vmem:[%s4 + $0x8] sm:$0xff] %v444
  %477 = vst [vmem:[%s4 + $0x10] sm:$0xff] %v445
  %478 = vst [vmem:[%s4 + $0x18] sm:$0xff] %v446
  %479 = vst [vmem:[%s4 + $0x20] sm:$0xff] %v447
  %480 = vst [vmem:[%s4 + $0x28] sm:$0xff] %v448
  %481 = vst [vmem:[%s4 + $0x30] sm:$0xff] %v449
  %482 = vst [vmem:[%s4 + $0x38] sm:$0xff] %v450
  %483 = vst [vmem:[%s4 + $0x40] sm:$0xff] %v451
  %484 = vst [vmem:[%s4 + $0x48] sm:$0xff] %v452
  %485 = vst [vmem:[%s4 + $0x50] sm:$0xff] %v453
  %486 = vst [vmem:[%s4 + $0x58] sm:$0xff] %v454
  %487 = vst [vmem:[%s4 + $0x60] sm:$0xff] %v455
  %488 = vst [vmem:[%s4 + $0x68] sm:$0xff] %v456
  %489 = vst [vmem:[%s4 + $0x70] sm:$0xff] %v457
  %490 = vst [vmem:[%s4 + $0x78] sm:$0xff] %v458
  // Predicated region
  $region18: #{_lambda_.1} parent=0 // pred_check
    _
  $region19: #{_lambda_.1} parent=0 // pred_check_branch
    %492 = sbr.rel (0) target = $region21
  $region20: #{_lambda_.1} parent=0 // pred_region
    _
  $region21: #{_lambda_.1} parent=0 // pred_fallthru
    _
  // Predicated region
  $region22: #{_lambda_.1} parent=0 // pred_check
    _
  $region23: #{_lambda_.1} parent=0 // pred_check_branch
    %494 = sbr.rel (0) target = $region25
  $region24: #{_lambda_.1} parent=0 // pred_region
    _
  $region25: #{_lambda_.1} parent=0 // pred_fallthru
    _

</llo_original>
